<compile_context>
chip_gen: v5e
topology: v5e:2x2
jax: 0.10.0
libtpu: 0.0.40
codegen_flags: <defaults>
</compile_context>

<pallas_src>
import functools

import jax
import jax.numpy as jnp
import numpy as np
from jax.experimental import pallas as pl
from jax.experimental.pallas import tpu as pltpu


def sdpa_kernel(q_ref, k_ref, v_ref, o_ref, *attn_refs, temperature):
    # q_ref: (1, 1, TILE_L, Dk) bf16   k_ref: (1, 1, Lk, Dk) bf16
    # v_ref: (1, 1, Lk, Dv)   bf16     o_ref: (1, 1, TILE_L, Dv) f32
    # attn_refs: () or ((1, 1, TILE_L, Lk) bf16,)
    inv_temp = 1.0 / temperature

    q = q_ref[0, 0]   # (TL, Dk) bf16
    k = k_ref[0, 0]   # (Lk, Dk) bf16
    v = v_ref[0, 0]   # (Lk, Dv) bf16

    # MXU matmul with f32 accumulation; contract on the feature axis of both
    # operands (no materialized k^T). Fold 1/temperature into the f32 scores.
    scores = jax.lax.dot_general(
        q, k,
        dimension_numbers=(((1,), (1,)), ((), ())),
        preferred_element_type=jnp.float32,
    ) * inv_temp                                          # (TL, Lk) f32

    # Softmax over keys, strictly f32 (v5e has no bf16 VPU/EUP).
    m = jnp.max(scores, axis=-1, keepdims=True)
    e = jnp.exp(scores - m)
    denom = jnp.sum(e, axis=-1, keepdims=True)
    attn = e * pl.reciprocal(denom, approx=True)          # (TL, Lk) f32

    if attn_refs:
        # Single contiguous slab store of the (bf16) attention probabilities.
        attn_refs[0][0, 0] = attn.astype(attn_refs[0].dtype)

    out = jnp.dot(attn.astype(jnp.bfloat16), v,
                  preferred_element_type=jnp.float32)     # (TL, Dv) f32
    o_ref[0, 0] = out.astype(o_ref.dtype)


def _build_call(B, H, Lq, Lk, Dk, Dv, tile_l, temperature, return_attn,
                single_buffer_kv, attn_dtype):
    kernel = functools.partial(sdpa_kernel, temperature=float(temperature))

    kv_bufs = 1 if single_buffer_kv else 2
    kv_kwargs = {"pipeline_mode": pl.Buffered(1)} if single_buffer_kv else {}

    in_specs = [
        # query tile: varies with all grid axes
        pl.BlockSpec((1, 1, tile_l, Dk), lambda b, h, i: (b, h, i, 0)),
        # keys / values: resident across the inner query-tile axis
        pl.BlockSpec((1, 1, Lk, Dk), lambda b, h, i: (b, h, 0, 0), **kv_kwargs),
        pl.BlockSpec((1, 1, Lk, Dv), lambda b, h, i: (b, h, 0, 0), **kv_kwargs),
    ]
    out_specs = [pl.BlockSpec((1, 1, tile_l, Dv), lambda b, h, i: (b, h, i, 0))]
    out_shape = [jax.ShapeDtypeStruct((B, H, Lq, Dv), jnp.float32)]
    if return_attn:
        out_specs.append(
            pl.BlockSpec((1, 1, tile_l, Lk), lambda b, h, i: (b, h, i, 0)))
        out_shape.append(jax.ShapeDtypeStruct((B, H, Lq, Lk), attn_dtype))

    # Explicit VMEM budget from the actual buffer sizes (+2x headroom, 8 MiB floor).
    attn_bytes = (2 * tile_l * Lk * np.dtype(attn_dtype).itemsize) if return_attn else 0
    needed = (2 * tile_l * Dk * 2        # Q   (double-buffered, bf16)
              + kv_bufs * Lk * Dk * 2    # K   (bf16)
              + kv_bufs * Lk * Dv * 2    # V   (bf16)
              + 2 * tile_l * Dv * 4      # out (double-buffered, f32)
              + attn_bytes)              # attn probs
    vmem_limit = int(max(8 << 20, min(64 << 20, 2 * needed)))

    return pl.pallas_call(
        kernel,
        out_shape=tuple(out_shape),
        grid_spec=pltpu.PrefetchScalarGridSpec(
            num_scalar_prefetch=0,
            grid=(B, H, Lq // tile_l),
            in_specs=in_specs,
            out_specs=tuple(out_specs),
        ),
        compiler_params=pltpu.CompilerParams(
            dimension_semantics=("parallel", "parallel", "arbitrary"),
            vmem_limit_bytes=vmem_limit,
        ),
    )


def scaled_dot_product_attention(q, k, v, *, temperature, tile_l=None,
                                 return_attn=True, attn_dtype=jnp.bfloat16,
                                 single_buffer_kv=True):
    """q: (B, H, Lq, Dk), k: (B, H, Lk, Dk), v: (B, H, Lk, Dv)."""
    B, H, Lq, Dk = q.shape
    _, _, Lk, Dv = v.shape
    assert k.shape == (B, H, Lk, Dk)

    if tile_l is None:
        tile_l = Lq
        for cand in (512, 256, 128):   # sweep per generation; smaller on v7x
            if Lq % cand == 0:
                tile_l = cand
                break
    assert Lq % tile_l == 0, "Lq must be divisible by the query tile size"

    # Pre-cast once in the wrapper: halves Q/K/V DMA bytes + VMEM footprint and
    # removes the per-step in-kernel casts; softmax math stays f32 in the kernel.
    q = q.astype(jnp.bfloat16)
    k = k.astype(jnp.bfloat16)
    v = v.astype(jnp.bfloat16)

    def run(single_buffer):
        call = _build_call(B, H, Lq, Lk, Dk, Dv, tile_l, temperature,
                           return_attn, single_buffer, attn_dtype)
        return call(q, k, v)

    if single_buffer_kv:
        try:
            outs = run(True)
        except Exception:
            # pipeline_mode=pl.Buffered(1) unsupported on this jax/libtpu:
            # fall back to the default double-buffered K/V specs.
            outs = run(False)
    else:
        outs = run(False)

    if return_attn:
        return outs[0], outs[1]
    return outs[0]


def reference(q, k, v, temperature):
    # Pure-JAX f32 reference mirroring the PyTorch forward (eval mode, no mask).
    attn = jnp.einsum("bhqd,bhkd->bhqk", q / temperature, k)
    attn = jax.nn.softmax(attn, axis=-1)
    out = jnp.einsum("bhqk,bhkd->bhqd", attn, v)
    return out, attn


if __name__ == "__main__":
    B, H, L, Dk, Dv = 2, 4, 8, 8, 8
    temperature = Dk ** 0.5

    key = jax.random.PRNGKey(0)
    kq, kk, kv = jax.random.split(key, 3)
    q = jax.random.normal(kq, (B, H, L, Dk), jnp.float32)
    k = jax.random.normal(kk, (B, H, L, Dk), jnp.float32)
    v = jax.random.normal(kv, (B, H, L, Dv), jnp.float32)

    out, attn = scaled_dot_product_attention(q, k, v, temperature=temperature)
    out = jax.block_until_ready(out)
    attn = jax.block_until_ready(attn)

    ref_out, ref_attn = reference(q, k, v, temperature)

    assert out.shape == (B, H, L, Dv) and attn.shape == (B, H, L, L)
    # bf16 matmul operands / bf16 stored probs + approx reciprocal -> loosened tol.
    assert jnp.allclose(out, ref_out, atol=5e-2, rtol=5e-2), "output mismatch"
    assert jnp.allclose(attn.astype(jnp.float32), ref_attn,
                        atol=3e-2, rtol=3e-2), "attn mismatch"

    print("KERNEL_OK")
</pallas_src>

<mosaic_0001>
module attributes {stable_mosaic.version = 11 : i64} {
  func.func @sdpa_kernel(%arg0: i32, %arg1: i32, %arg2: i32, %arg3: memref<1x1x8x8xbf16, #tpu.memory_space<vmem>>, %arg4: memref<1x1x8x8xbf16, #tpu.memory_space<vmem>>, %arg5: memref<1x1x8x8xbf16, #tpu.memory_space<vmem>>, %arg6: memref<1x1x8x8xf32, #tpu.memory_space<vmem>>, %arg7: memref<1x1x8x8xbf16, #tpu.memory_space<vmem>>) attributes {dimension_semantics = [#tpu.dimension_semantics<parallel>, #tpu.dimension_semantics<parallel>, #tpu.dimension_semantics<arbitrary>], iteration_bounds = array<i64: 2, 4, 1>, scalar_prefetch = 0 : i64, scratch_operands = 0 : i64, tpu.core_type = #tpu.core_type<tc>, window_params = [{transform_indices = @transform_0, window_bounds = array<i64: 1, 1, 8, 8>}, {pipeline_mode = #tpu.pipeline_mode<synchronous>, transform_indices = @transform_1, window_bounds = array<i64: 1, 1, 8, 8>}, {pipeline_mode = #tpu.pipeline_mode<synchronous>, transform_indices = @transform_2, window_bounds = array<i64: 1, 1, 8, 8>}, {transform_indices = @transform_3, window_bounds = array<i64: 1, 1, 8, 8>}, {transform_indices = @transform_4, window_bounds = array<i64: 1, 1, 8, 8>}]} {
    %c0 = arith.constant 0 : index
    %c0_0 = arith.constant 0 : index
    %c0_1 = arith.constant 0 : index
    %c0_2 = arith.constant 0 : index
    %0 = vector.load %arg3[%c0, %c0_0, %c0_1, %c0_2] : memref<1x1x8x8xbf16, #tpu.memory_space<vmem>>, vector<1x1x8x8xbf16>
    %1 = vector.shape_cast %0 : vector<1x1x8x8xbf16> to vector<8x8xbf16>
    %c0_3 = arith.constant 0 : index
    %c0_4 = arith.constant 0 : index
    %c0_5 = arith.constant 0 : index
    %c0_6 = arith.constant 0 : index
    %2 = vector.load %arg4[%c0_3, %c0_4, %c0_5, %c0_6] : memref<1x1x8x8xbf16, #tpu.memory_space<vmem>>, vector<1x1x8x8xbf16>
    %3 = vector.shape_cast %2 : vector<1x1x8x8xbf16> to vector<8x8xbf16>
    %c0_7 = arith.constant 0 : index
    %c0_8 = arith.constant 0 : index
    %c0_9 = arith.constant 0 : index
    %c0_10 = arith.constant 0 : index
    %4 = vector.load %arg5[%c0_7, %c0_8, %c0_9, %c0_10] : memref<1x1x8x8xbf16, #tpu.memory_space<vmem>>, vector<1x1x8x8xbf16>
    %5 = vector.shape_cast %4 : vector<1x1x8x8xbf16> to vector<8x8xbf16>
    %cst = arith.constant dense<0.000000e+00> : vector<8x8xf32>
    %6 = tpu.matmul %1, %3, %cst {dimension_numbers = #tpu.dot_dimension_numbers<[1], [1], [0], [0], [0, 0, 1, 0], [], []>} : vector<8x8xbf16>, vector<8x8xbf16>, vector<8x8xf32> -> vector<8x8xf32>
    %cst_11 = arith.constant 0.353553385 : f32
    %7 = vector.broadcast %cst_11 : f32 to vector<8x8xf32>
    %8 = arith.mulf %6, %7 : vector<8x8xf32>
    %cst_12 = arith.constant dense<0xFF800000> : vector<8xf32>
    %9 = vector.multi_reduction <maximumf>, %8, %cst_12 [1] : vector<8x8xf32> to vector<8xf32>
    %10 = vector.shape_cast %9 : vector<8xf32> to vector<8x1xf32>
    %11 = vector.broadcast %10 : vector<8x1xf32> to vector<8x8xf32>
    %12 = arith.subf %8, %11 : vector<8x8xf32>
    %13 = math.exp %12 : vector<8x8xf32>
    %cst_13 = arith.constant dense<0.000000e+00> : vector<8xf32>
    %14 = vector.multi_reduction <add>, %13, %cst_13 [1] : vector<8x8xf32> to vector<8xf32>
    %15 = vector.shape_cast %14 : vector<8xf32> to vector<8x1xf32>
    %16 = tpu.reciprocal %15 {approx = true} : vector<8x1xf32> -> vector<8x1xf32>
    %17 = vector.broadcast %16 : vector<8x1xf32> to vector<8x8xf32>
    %18 = arith.mulf %13, %17 : vector<8x8xf32>
    %19 = arith.truncf %18 : vector<8x8xf32> to vector<8x8xbf16>
    %c0_14 = arith.constant 0 : index
    %c0_15 = arith.constant 0 : index
    %c0_16 = arith.constant 0 : index
    %c0_17 = arith.constant 0 : index
    %20 = vector.load %arg7[%c0_14, %c0_15, %c0_16, %c0_17] : memref<1x1x8x8xbf16, #tpu.memory_space<vmem>>, vector<1x1x8x8xbf16>
    %21 = vector.shape_cast %20 : vector<1x1x8x8xbf16> to vector<8x8xbf16>
    %22 = vector.shape_cast %19 : vector<8x8xbf16> to vector<1x1x8x8xbf16>
    tpu.vector_store %arg7[%c0_14, %c0_15, %c0_16, %c0_17], %22 {strides = array<i32>} : memref<1x1x8x8xbf16, #tpu.memory_space<vmem>>, vector<1x1x8x8xbf16>,
    %23 = arith.truncf %18 : vector<8x8xf32> to vector<8x8xbf16>
    %cst_18 = arith.constant dense<0.000000e+00> : vector<8x8xf32>
    %24 = tpu.matmul %23, %5, %cst_18 {dimension_numbers = #tpu.dot_dimension_numbers<[1], [0], [0], [1], [0, 0, 1, 1], [], []>} : vector<8x8xbf16>, vector<8x8xbf16>, vector<8x8xf32> -> vector<8x8xf32>
    %c0_19 = arith.constant 0 : index
    %c0_20 = arith.constant 0 : index
    %c0_21 = arith.constant 0 : index
    %c0_22 = arith.constant 0 : index
    %25 = vector.load %arg6[%c0_19, %c0_20, %c0_21, %c0_22] : memref<1x1x8x8xf32, #tpu.memory_space<vmem>>, vector<1x1x8x8xf32>
    %26 = vector.shape_cast %25 : vector<1x1x8x8xf32> to vector<8x8xf32>
    %27 = vector.shape_cast %24 : vector<8x8xf32> to vector<1x1x8x8xf32>
    tpu.vector_store %arg6[%c0_19, %c0_20, %c0_21, %c0_22], %27 {strides = array<i32>} : memref<1x1x8x8xf32, #tpu.memory_space<vmem>>, vector<1x1x8x8xf32>,
    return
  }
  func.func @transform_0(%arg0: i32, %arg1: i32, %arg2: i32) -> (i32, i32, i32, i32) {
    %c0_i32 = arith.constant 0 : i32
    %c0_i32_0 = arith.constant 0 : i32
    return %arg0, %arg1, %arg2, %c0_i32 : i32, i32, i32, i32
  }
  func.func @transform_1(%arg0: i32, %arg1: i32, %arg2: i32) -> (i32, i32, i32, i32) {
    %c0_i32 = arith.constant 0 : i32
    %c0_i32_0 = arith.constant 0 : i32
    %c0_i32_1 = arith.constant 0 : i32
    return %arg0, %arg1, %c0_i32, %c0_i32_0 : i32, i32, i32, i32
  }
  func.func @transform_2(%arg0: i32, %arg1: i32, %arg2: i32) -> (i32, i32, i32, i32) {
    %c0_i32 = arith.constant 0 : i32
    %c0_i32_0 = arith.constant 0 : i32
    %c0_i32_1 = arith.constant 0 : i32
    return %arg0, %arg1, %c0_i32, %c0_i32_0 : i32, i32, i32, i32
  }
  func.func @transform_3(%arg0: i32, %arg1: i32, %arg2: i32) -> (i32, i32, i32, i32) {
    %c0_i32 = arith.constant 0 : i32
    %c0_i32_0 = arith.constant 0 : i32
    return %arg0, %arg1, %arg2, %c0_i32 : i32, i32, i32, i32
  }
  func.func @transform_4(%arg0: i32, %arg1: i32, %arg2: i32) -> (i32, i32, i32, i32) {
    %c0_i32 = arith.constant 0 : i32
    %c0_i32_0 = arith.constant 0 : i32
    return %arg0, %arg1, %arg2, %c0_i32 : i32, i32, i32, i32
  }
}

module attributes {stable_mosaic.version = 11 : i64} {
  func.func @sdpa_kernel(%arg0: i32, %arg1: i32, %arg2: i32, %arg3: memref<1x1x8x8xbf16, #tpu.memory_space<vmem>>, %arg4: memref<1x1x8x8xbf16, #tpu.memory_space<vmem>>, %arg5: memref<1x1x8x8xbf16, #tpu.memory_space<vmem>>, %arg6: memref<1x1x8x8xf32, #tpu.memory_space<vmem>>, %arg7: memref<1x1x8x8xbf16, #tpu.memory_space<vmem>>) attributes {dimension_semantics = [#tpu.dimension_semantics<parallel>, #tpu.dimension_semantics<parallel>, #tpu.dimension_semantics<arbitrary>], iteration_bounds = array<i64: 2, 4, 1>, scalar_prefetch = 0 : i64, scratch_operands = 0 : i64, tpu.core_type = #tpu.core_type<tc>, window_params = [{transform_indices = @transform_0, window_bounds = array<i64: 1, 1, 8, 8>}, {transform_indices = @transform_1, window_bounds = array<i64: 1, 1, 8, 8>}, {transform_indices = @transform_2, window_bounds = array<i64: 1, 1, 8, 8>}, {transform_indices = @transform_3, window_bounds = array<i64: 1, 1, 8, 8>}, {transform_indices = @transform_4, window_bounds = array<i64: 1, 1, 8, 8>}]} {
    %c0 = arith.constant 0 : index
    %c0_0 = arith.constant 0 : index
    %c0_1 = arith.constant 0 : index
    %c0_2 = arith.constant 0 : index
    %0 = vector.load %arg3[%c0, %c0_0, %c0_1, %c0_2] : memref<1x1x8x8xbf16, #tpu.memory_space<vmem>>, vector<1x1x8x8xbf16>
    %1 = vector.shape_cast %0 : vector<1x1x8x8xbf16> to vector<8x8xbf16>
    %c0_3 = arith.constant 0 : index
    %c0_4 = arith.constant 0 : index
    %c0_5 = arith.constant 0 : index
    %c0_6 = arith.constant 0 : index
    %2 = vector.load %arg4[%c0_3, %c0_4, %c0_5, %c0_6] : memref<1x1x8x8xbf16, #tpu.memory_space<vmem>>, vector<1x1x8x8xbf16>
    %3 = vector.shape_cast %2 : vector<1x1x8x8xbf16> to vector<8x8xbf16>
    %c0_7 = arith.constant 0 : index
    %c0_8 = arith.constant 0 : index
    %c0_9 = arith.constant 0 : index
    %c0_10 = arith.constant 0 : index
    %4 = vector.load %arg5[%c0_7, %c0_8, %c0_9, %c0_10] : memref<1x1x8x8xbf16, #tpu.memory_space<vmem>>, vector<1x1x8x8xbf16>
    %5 = vector.shape_cast %4 : vector<1x1x8x8xbf16> to vector<8x8xbf16>
    %cst = arith.constant dense<0.000000e+00> : vector<8x8xf32>
    %6 = tpu.matmul %1, %3, %cst {dimension_numbers = #tpu.dot_dimension_numbers<[1], [1], [0], [0], [0, 0, 1, 0], [], []>} : vector<8x8xbf16>, vector<8x8xbf16>, vector<8x8xf32> -> vector<8x8xf32>
    %cst_11 = arith.constant 0.353553385 : f32
    %7 = vector.broadcast %cst_11 : f32 to vector<8x8xf32>
    %8 = arith.mulf %6, %7 : vector<8x8xf32>
    %cst_12 = arith.constant dense<0xFF800000> : vector<8xf32>
    %9 = vector.multi_reduction <maximumf>, %8, %cst_12 [1] : vector<8x8xf32> to vector<8xf32>
    %10 = vector.shape_cast %9 : vector<8xf32> to vector<8x1xf32>
    %11 = vector.broadcast %10 : vector<8x1xf32> to vector<8x8xf32>
    %12 = arith.subf %8, %11 : vector<8x8xf32>
    %13 = math.exp %12 : vector<8x8xf32>
    %cst_13 = arith.constant dense<0.000000e+00> : vector<8xf32>
    %14 = vector.multi_reduction <add>, %13, %cst_13 [1] : vector<8x8xf32> to vector<8xf32>
    %15 = vector.shape_cast %14 : vector<8xf32> to vector<8x1xf32>
    %16 = tpu.reciprocal %15 {approx = true} : vector<8x1xf32> -> vector<8x1xf32>
    %17 = vector.broadcast %16 : vector<8x1xf32> to vector<8x8xf32>
    %18 = arith.mulf %13, %17 : vector<8x8xf32>
    %19 = arith.truncf %18 : vector<8x8xf32> to vector<8x8xbf16>
    %c0_14 = arith.constant 0 : index
    %c0_15 = arith.constant 0 : index
    %c0_16 = arith.constant 0 : index
    %c0_17 = arith.constant 0 : index
    %20 = vector.load %arg7[%c0_14, %c0_15, %c0_16, %c0_17] : memref<1x1x8x8xbf16, #tpu.memory_space<vmem>>, vector<1x1x8x8xbf16>
    %21 = vector.shape_cast %20 : vector<1x1x8x8xbf16> to vector<8x8xbf16>
    %22 = vector.shape_cast %19 : vector<8x8xbf16> to vector<1x1x8x8xbf16>
    tpu.vector_store %arg7[%c0_14, %c0_15, %c0_16, %c0_17], %22 {strides = array<i32>} : memref<1x1x8x8xbf16, #tpu.memory_space<vmem>>, vector<1x1x8x8xbf16>,
    %23 = arith.truncf %18 : vector<8x8xf32> to vector<8x8xbf16>
    %cst_18 = arith.constant dense<0.000000e+00> : vector<8x8xf32>
    %24 = tpu.matmul %23, %5, %cst_18 {dimension_numbers = #tpu.dot_dimension_numbers<[1], [0], [0], [1], [0, 0, 1, 1], [], []>} : vector<8x8xbf16>, vector<8x8xbf16>, vector<8x8xf32> -> vector<8x8xf32>
    %c0_19 = arith.constant 0 : index
    %c0_20 = arith.constant 0 : index
    %c0_21 = arith.constant 0 : index
    %c0_22 = arith.constant 0 : index
    %25 = vector.load %arg6[%c0_19, %c0_20, %c0_21, %c0_22] : memref<1x1x8x8xf32, #tpu.memory_space<vmem>>, vector<1x1x8x8xf32>
    %26 = vector.shape_cast %25 : vector<1x1x8x8xf32> to vector<8x8xf32>
    %27 = vector.shape_cast %24 : vector<8x8xf32> to vector<1x1x8x8xf32>
    tpu.vector_store %arg6[%c0_19, %c0_20, %c0_21, %c0_22], %27 {strides = array<i32>} : memref<1x1x8x8xf32, #tpu.memory_space<vmem>>, vector<1x1x8x8xf32>,
    return
  }
  func.func @transform_0(%arg0: i32, %arg1: i32, %arg2: i32) -> (i32, i32, i32, i32) {
    %c0_i32 = arith.constant 0 : i32
    %c0_i32_0 = arith.constant 0 : i32
    return %arg0, %arg1, %arg2, %c0_i32 : i32, i32, i32, i32
  }
  func.func @transform_1(%arg0: i32, %arg1: i32, %arg2: i32) -> (i32, i32, i32, i32) {
    %c0_i32 = arith.constant 0 : i32
    %c0_i32_0 = arith.constant 0 : i32
    %c0_i32_1 = arith.constant 0 : i32
    return %arg0, %arg1, %c0_i32, %c0_i32_0 : i32, i32, i32, i32
  }
  func.func @transform_2(%arg0: i32, %arg1: i32, %arg2: i32) -> (i32, i32, i32, i32) {
    %c0_i32 = arith.constant 0 : i32
    %c0_i32_0 = arith.constant 0 : i32
    %c0_i32_1 = arith.constant 0 : i32
    return %arg0, %arg1, %c0_i32, %c0_i32_0 : i32, i32, i32, i32
  }
  func.func @transform_3(%arg0: i32, %arg1: i32, %arg2: i32) -> (i32, i32, i32, i32) {
    %c0_i32 = arith.constant 0 : i32
    %c0_i32_0 = arith.constant 0 : i32
    return %arg0, %arg1, %arg2, %c0_i32 : i32, i32, i32, i32
  }
  func.func @transform_4(%arg0: i32, %arg1: i32, %arg2: i32) -> (i32, i32, i32, i32) {
    %c0_i32 = arith.constant 0 : i32
    %c0_i32_0 = arith.constant 0 : i32
    return %arg0, %arg1, %arg2, %c0_i32 : i32, i32, i32, i32
  }
}

</mosaic_0001>

<llo_original>
// kernel: tpu_custom_call.1
$region0: #{tpu_custom_call.1}
  #allocation0 [shape = 'u32[]', space=smem, size = 0x4, offset = 0x4, fixed_abs, tag = 'smem constant byte address 0x4 - core index']
  #allocation1 [shape = 'u32[72,128]{1,0:T(1,128)}', space=vmem, size = 0x9000, scoped, tag = 'internal scratch']
  %s0 = inlined_call_operand.hbm [shape: bf16[2,4,8,8], index: 0, kind: input, shape index: {}]
  %s1 = inlined_call_operand.hbm [shape: bf16[2,4,8,8], index: 1, kind: input, shape index: {}]
  %s2 = inlined_call_operand.hbm [shape: bf16[2,4,8,8], index: 2, kind: input, shape index: {}]
  %s3 = inlined_call_operand.hbm [shape: f32[2,4,8,8], index: 3, kind: output, shape index: {0}]
  %s4 = inlined_call_operand.hbm [shape: bf16[2,4,8,8], index: 4, kind: output, shape index: {1}]
  %5 = xla_tuple %s3, %s4
  %s6 = sld [smem:[#allocation0]]
  $region65: #{tpu_custom_call.1} parent=0
    _
  %s8 = ssub.s32 1, %s6
  %s9 = scalar_select 0, %s8, %s6
  $region1: #{tpu_custom_call.1} parent=0
    #allocation2 [shape = 'u8[4096]{0}', space=vmem, size = 0x1000, scoped, tag = 'input window, operand 0']
    #allocation3 [shape = 's32[2]{0}', space=sflag, size = 0x8, scoped, tag = 'scoped memory for tpu_custom_call.1']
    #allocation4 [shape = 's32[2]{0}', space=sflag, size = 0x8, scoped, tag = 'scoped memory for tpu_custom_call.1']
    #allocation5 [shape = 'u8[2048]{0}', space=vmem, size = 0x800, scoped, tag = 'input window, operand 1, single buffered']
    #allocation6 [shape = 's32[1]{0}', space=sflag, size = 0x4, scoped, tag = 'scoped memory for tpu_custom_call.1']
    #allocation7 [shape = 'u8[2048]{0}', space=vmem, size = 0x800, scoped, tag = 'input window, operand 2, single buffered']
    #allocation8 [shape = 'u8[8192]{0}', space=vmem, size = 0x2000, scoped, tag = 'output window, operand 0']
    #allocation9 [shape = 'u8[4096]{0}', space=vmem, size = 0x1000, scoped, tag = 'output window, operand 1']
    #allocation10 [shape = 's32[2]{0}', space=sflag, size = 0x8, scoped, tag = 'scoped memory for tpu_custom_call.1']
    %10 = vsyncpa [#allocation3], 0
    %s11 = scalar_lea.sflag [#allocation3], 1
    %12 = vsyncpa %s11, 0
    %13 = vsyncpa [#allocation6], 0
    %14 = vsyncpa [#allocation4], 0
    %s15 = scalar_lea.sflag [#allocation4], 1
    %16 = vsyncpa %s15, 0
    %17 = vsyncpa [#allocation10], 0
    %s18 = scalar_lea.sflag [#allocation10], 1
    %19 = vsyncpa %s18, 0
    loop: start=0, step=1, limit=10
    $region2: #{tpu_custom_call.1} parent=1 // loop_pre_header
      _
    $region3: #{tpu_custom_call.1} parent=1 // loop_header
      %s21 = sphi 0, %s25
      %p22 = scmp.ge.s32.totalorder %s21, 10
      %s28 = sphi 0, %s47
      %s29 = sphi 0, %s43
      %s30 = sphi 0, %s39
      %s31 = sphi 0, %s28
      %s32 = sphi 0, %s29
      %s33 = sphi 0, %s30
      %s34 = sphi 0, %s31
      %s35 = sphi 0, %s32
      %s36 = sphi 0, %s33
      %s54 = sphi 0, %s56
      %s57 = sphi 0, %s54
      %s58 = sphi 0, %s57
      %s74 = sphi 0, %s58
      %s82 = sphi 0, %s84
      %s85 = sphi 0, %s82
      %s86 = sphi 0, %s85
      %s102 = sphi 0, %s86
      %s110 = sphi 0, %s112
      %s113 = sphi 0, %s110
      %s114 = sphi 0, %s113
      %s130 = sphi 0, %s114
      %s140 = sphi 0, %s142
      %s143 = sphi 0, %s140
      %s144 = sphi 0, %s143
      %s160 = sphi 0, %s144
      %s170 = sphi 0, %s172
      %s173 = sphi 0, %s170
      %s174 = sphi 0, %s173
      %s190 = sphi 0, %s174
    $region4: #{tpu_custom_call.1} parent=1 // loop_header_branch
      %24 = sbr.rel (%p22) target = $region8
    $region5: #{tpu_custom_call.1} parent=1 // loop_body
      %s26 = ssub.s32 %s21, 1
      %s27 = ssub.s32 %s21, 2
      %s37 = sadd.s32 1, %s30
      %p38 = scmp.ge.s32.totalorder %s37, 1
      %s39 = scalar_select %p38, 0, %s37
      %s40 = sadd.s32 1, %s29
      %s41 = scalar_select %p38, %s40, %s29
      %p42 = scmp.ge.s32.totalorder %s41, 4
      %s43 = scalar_select %p42, 0, %s41
      %s44 = sadd.s32 1, %s28
      %s45 = scalar_select %p42, %s44, %s28
      %p46 = scmp.ge.s32.totalorder %s45, 2
      %s47 = scalar_select %p46, 0, %s45
      %s48 = ssub.s32 %s28, %s47
      %s49 = ssub.s32 %s29, %s43
      %s50 = sor.u32 %s48, %s49
      %s51 = ssub.s32 %s30, %s39
      %s52 = sor.u32 %s50, %s51
      %p53 = scmp.eq.s32.totalorder %s52, 0
      %s55 = sadd.s32 %s54, 1
      %s56 = scalar_select %p53, %s54, %s55
      %p59 = pneg %p53
      %p60 = scmp.eq.s32.totalorder %s21, 7
      %p61 = por %p59, %p60
      %p62 = scmp.ne.s32.totalorder %s54, %s57
      %p63 = scmp.eq.s32.totalorder %s21, 0
      %p64 = por %p62, %p63
      %p65 = scmp.ne.s32.totalorder %s54, %s57
      %p66 = scmp.eq.s32.totalorder %s26, 7
      %p67 = por %p65, %p66
      %p68 = scmp.ne.s32.totalorder %s57, %s58
      %p69 = scmp.eq.s32.totalorder %s26, 0
      %p70 = por %p68, %p69
      %p71 = scmp.ne.s32.totalorder %s57, %s58
      %p72 = scmp.eq.s32.totalorder %s27, 7
      %p73 = por %p71, %p72
      %p75 = scmp.ne.s32.totalorder %s58, %s74
      %p76 = scmp.eq.s32.totalorder %s27, 0
      %p77 = por %p75, %p76
      %s78 = ssub.s32 %s28, %s47
      %s79 = ssub.s32 %s29, %s43
      %s80 = sor.u32 %s78, %s79
      %p81 = scmp.eq.s32.totalorder %s80, 0
      %s83 = sadd.s32 %s82, 1
      %s84 = scalar_select %p81, %s82, %s83
      %p87 = pneg %p81
      %p88 = scmp.eq.s32.totalorder %s21, 7
      %p89 = por %p87, %p88
      %p90 = scmp.ne.s32.totalorder %s82, %s85
      %p91 = scmp.eq.s32.totalorder %s21, 0
      %p92 = por %p90, %p91
      %p93 = scmp.ne.s32.totalorder %s82, %s85
      %p94 = scmp.eq.s32.totalorder %s26, 7
      %p95 = por %p93, %p94
      %p96 = scmp.ne.s32.totalorder %s85, %s86
      %p97 = scmp.eq.s32.totalorder %s26, 0
      %p98 = por %p96, %p97
      %p99 = scmp.ne.s32.totalorder %s85, %s86
      %p100 = scmp.eq.s32.totalorder %s27, 7
      %p101 = por %p99, %p100
      %p103 = scmp.ne.s32.totalorder %s86, %s102
      %p104 = scmp.eq.s32.totalorder %s27, 0
      %p105 = por %p103, %p104
      %s106 = ssub.s32 %s28, %s47
      %s107 = ssub.s32 %s29, %s43
      %s108 = sor.u32 %s106, %s107
      %p109 = scmp.eq.s32.totalorder %s108, 0
      %s111 = sadd.s32 %s110, 1
      %s112 = scalar_select %p109, %s110, %s111
      %p115 = pneg %p109
      %p116 = scmp.eq.s32.totalorder %s21, 7
      %p117 = por %p115, %p116
      %p118 = scmp.ne.s32.totalorder %s110, %s113
      %p119 = scmp.eq.s32.totalorder %s21, 0
      %p120 = por %p118, %p119
      %p121 = scmp.ne.s32.totalorder %s110, %s113
      %p122 = scmp.eq.s32.totalorder %s26, 7
      %p123 = por %p121, %p122
      %p124 = scmp.ne.s32.totalorder %s113, %s114
      %p125 = scmp.eq.s32.totalorder %s26, 0
      %p126 = por %p124, %p125
      %p127 = scmp.ne.s32.totalorder %s113, %s114
      %p128 = scmp.eq.s32.totalorder %s27, 7
      %p129 = por %p127, %p128
      %p131 = scmp.ne.s32.totalorder %s114, %s130
      %p132 = scmp.eq.s32.totalorder %s27, 0
      %p133 = por %p131, %p132
      %s134 = ssub.s32 %s28, %s47
      %s135 = ssub.s32 %s29, %s43
      %s136 = sor.u32 %s134, %s135
      %s137 = ssub.s32 %s30, %s39
      %s138 = sor.u32 %s136, %s137
      %p139 = scmp.eq.s32.totalorder %s138, 0
      %s141 = sadd.s32 %s140, 1
      %s142 = scalar_select %p139, %s140, %s141
      %p145 = pneg %p139
      %p146 = scmp.eq.s32.totalorder %s21, 7
      %p147 = por %p145, %p146
      %p148 = scmp.ne.s32.totalorder %s140, %s143
      %p149 = scmp.eq.s32.totalorder %s21, 0
      %p150 = por %p148, %p149
      %p151 = scmp.ne.s32.totalorder %s140, %s143
      %p152 = scmp.eq.s32.totalorder %s26, 7
      %p153 = por %p151, %p152
      %p154 = scmp.ne.s32.totalorder %s143, %s144
      %p155 = scmp.eq.s32.totalorder %s26, 0
      %p156 = por %p154, %p155
      %p157 = scmp.ne.s32.totalorder %s143, %s144
      %p158 = scmp.eq.s32.totalorder %s27, 7
      %p159 = por %p157, %p158
      %p161 = scmp.ne.s32.totalorder %s144, %s160
      %p162 = scmp.eq.s32.totalorder %s27, 0
      %p163 = por %p161, %p162
      %s164 = ssub.s32 %s28, %s47
      %s165 = ssub.s32 %s29, %s43
      %s166 = sor.u32 %s164, %s165
      %s167 = ssub.s32 %s30, %s39
      %s168 = sor.u32 %s166, %s167
      %p169 = scmp.eq.s32.totalorder %s168, 0
      %s171 = sadd.s32 %s170, 1
      %s172 = scalar_select %p169, %s170, %s171
      %p175 = pneg %p169
      %p176 = scmp.eq.s32.totalorder %s21, 7
      %p177 = por %p175, %p176
      %p178 = scmp.ne.s32.totalorder %s170, %s173
      %p179 = scmp.eq.s32.totalorder %s21, 0
      %p180 = por %p178, %p179
      %p181 = scmp.ne.s32.totalorder %s170, %s173
      %p182 = scmp.eq.s32.totalorder %s26, 7
      %p183 = por %p181, %p182
      %p184 = scmp.ne.s32.totalorder %s173, %s174
      %p185 = scmp.eq.s32.totalorder %s26, 0
      %p186 = por %p184, %p185
      %p187 = scmp.ne.s32.totalorder %s173, %s174
      %p188 = scmp.eq.s32.totalorder %s27, 7
      %p189 = por %p187, %p188
      %p191 = scmp.ne.s32.totalorder %s174, %s190
      %p192 = scmp.eq.s32.totalorder %s27, 0
      %p193 = por %p191, %p192
      %p194 = scmp.le.s32.totalorder 1, %s21
      %p195 = scmp.lt.s32.totalorder %s21, 9
      %p196 = pnand %p194, %p195
      %p197 = pneg %p196
      // Predicated region
      $region9: #{tpu_custom_call.1} parent=5 // pred_check
        _
      $region10: #{tpu_custom_call.1} parent=5 // pred_check_branch
        %199 = sbr.rel (%p196) target = $region12
      $region11: #{tpu_custom_call.1} parent=5 // pred_region
        %s200 = ssub.s32 %s21, 1
        // Predicated region
        $region13: #{tpu_custom_call.1} parent=11 // pred_check
          %p201 = pneg %p98
        $region14: #{tpu_custom_call.1} parent=11 // pred_check_branch
          %203 = sbr.rel (%p201) target = $region16
        $region15: #{tpu_custom_call.1} parent=11 // pred_region
          %205 = vsyncadd [#allocation6], 0
          %s206 = smul.addr %s31, 4
          %s207 = sadd.s32 %s32, %s206
          %s208 = smul.addr %s207, 4
          %s209 = scalar_lea.hbm %s1, %s208
          %s211 = sshll.u32 %s209, 4
          %s212 = int_to_ptr.hbm [resolvable:$true] %s211
          %s213 = sshll.u32 [#allocation5], 4
          %s214 = int_to_ptr.vmem [resolvable:$true] %s213
          %216 = dma.hbm_to_vmem [thread:$0]  %s212, 64, %s214, [#allocation6]
        $region16: #{tpu_custom_call.1} parent=11 // pred_fallthru
          _
        // Predicated region
        $region17: #{tpu_custom_call.1} parent=11 // pred_check
          %p217 = pneg %p126
        $region18: #{tpu_custom_call.1} parent=11 // pred_check_branch
          %219 = sbr.rel (%p217) target = $region20
        $region19: #{tpu_custom_call.1} parent=11 // pred_region
          %221 = vsyncadd [#allocation6], 0
          %s222 = smul.addr %s31, 4
          %s223 = sadd.s32 %s32, %s222
          %s224 = smul.addr %s223, 4
          %s225 = scalar_lea.hbm %s2, %s224
          %s227 = sshll.u32 %s225, 4
          %s228 = int_to_ptr.hbm [resolvable:$true] %s227
          %s229 = sshll.u32 [#allocation7], 4
          %s230 = int_to_ptr.vmem [resolvable:$true] %s229
          %232 = dma.hbm_to_vmem [thread:$0]  %s228, 64, %s230, [#allocation6]
        $region20: #{tpu_custom_call.1} parent=11 // pred_fallthru
          _
      $region12: #{tpu_custom_call.1} parent=5 // pred_fallthru
        _
      %p233 = scmp.lt.s32.totalorder %s21, 8
      // Predicated region
      $region21: #{tpu_custom_call.1} parent=5 // pred_check
        %p234 = pneg %p233
      $region22: #{tpu_custom_call.1} parent=5 // pred_check_branch
        %236 = sbr.rel (%p234) target = $region24
      $region23: #{tpu_custom_call.1} parent=5 // pred_region
        // Predicated region
        $region25: #{tpu_custom_call.1} parent=23 // pred_check
          %p237 = pneg %p64
        $region26: #{tpu_custom_call.1} parent=23 // pred_check_branch
          %239 = sbr.rel (%p237) target = $region28
        $region27: #{tpu_custom_call.1} parent=23 // pred_region
          %s240 = sand.u32 %s54, 1
          %s241 = scalar_lea.sflag [#allocation3], %s240
          %s242 = sand.u32 %s54, 1
          %s243 = smul.addr %s242, 4
          %s244 = scalar_lea.vmem [#allocation2], %s243
          %246 = vsyncadd %s241, 0
          %s247 = sadd.s32 %s30, %s29
          %s248 = smul.addr %s28, 4
          %s249 = sadd.s32 %s247, %s248
          %s250 = smul.addr %s249, 4
          %s251 = scalar_lea.hbm %s0, %s250
          %s253 = sshll.u32 %s251, 4
          %s254 = int_to_ptr.hbm [resolvable:$true] %s253
          %s255 = sshll.u32 %s244, 4
          %s256 = int_to_ptr.vmem [resolvable:$true] %s255
          %258 = dma.hbm_to_vmem [thread:$0]  %s254, 64, %s256, %s241
        $region28: #{tpu_custom_call.1} parent=23 // pred_fallthru
          _
      $region24: #{tpu_custom_call.1} parent=5 // pred_fallthru
        _
      %p259 = scmp.le.s32.totalorder 1, %s21
      %p260 = scmp.lt.s32.totalorder %s21, 9
      %p261 = pnand %p259, %p260
      %p262 = pneg %p261
      // Predicated region
      $region29: #{tpu_custom_call.1} parent=5 // pred_check
        _
      $region30: #{tpu_custom_call.1} parent=5 // pred_check_branch
        %264 = sbr.rel (%p261) target = $region32
      $region31: #{tpu_custom_call.1} parent=5 // pred_region
        %s265 = ssub.s32 %s21, 1
        %s266 = sand.u32 %s57, 1
        %s267 = scalar_lea.sflag [#allocation3], %s266
        %s268 = sand.u32 %s57, 1
        %s269 = smul.addr %s268, 4
        %s270 = scalar_lea.vmem [#allocation2], %s269
        // Predicated region
        $region33: #{tpu_custom_call.1} parent=31 // pred_check
          %p271 = pneg %p70
        $region34: #{tpu_custom_call.1} parent=31 // pred_check_branch
          %273 = sbr.rel (%p271) target = $region36
        $region35: #{tpu_custom_call.1} parent=31 // pred_region
          %275 = dma.done %s267, 64
        $region36: #{tpu_custom_call.1} parent=31 // pred_fallthru
          _
        // Predicated region
        $region37: #{tpu_custom_call.1} parent=31 // pred_check
          %p276 = pneg %p98
        $region38: #{tpu_custom_call.1} parent=31 // pred_check_branch
          %278 = sbr.rel (%p276) target = $region40
        $region39: #{tpu_custom_call.1} parent=31 // pred_region
          %280 = dma.done [#allocation6], 64
        $region40: #{tpu_custom_call.1} parent=31 // pred_fallthru
          _
        // Predicated region
        $region41: #{tpu_custom_call.1} parent=31 // pred_check
          %p281 = pneg %p126
        $region42: #{tpu_custom_call.1} parent=31 // pred_check_branch
          %283 = sbr.rel (%p281) target = $region44
        $region43: #{tpu_custom_call.1} parent=31 // pred_region
          %285 = dma.done [#allocation6], 64
        $region44: #{tpu_custom_call.1} parent=31 // pred_fallthru
          _
        %s286 = sand.u32 %s57, 1
        %s287 = scalar_lea.sflag [#allocation3], %s286
        %s288 = sand.u32 %s57, 1
        %s289 = smul.addr %s288, 4
        %s290 = scalar_lea.vmem [#allocation2], %s289
        %p291 = pneg %p70
        %p292 = pneg %p67
        %p293 = pneg %p98
        %p294 = pneg %p95
        %p295 = pneg %p126
        %p296 = pneg %p123
        %p297 = pneg %p156
        %p298 = pneg %p153
        %s299 = sand.u32 %s143, 1
        %s300 = scalar_lea.sflag [#allocation4], %s299
        %s301 = sand.u32 %s143, 1
        %s302 = smul.addr %s301, 8
        %s303 = scalar_lea.vmem [#allocation8], %s302
        %p304 = pneg %p186
        %p305 = pneg %p183
        %s306 = sand.u32 %s173, 1
        %s307 = scalar_lea.sflag [#allocation10], %s306
        %s308 = sand.u32 %s173, 1
        %s309 = smul.addr %s308, 4
        %s310 = scalar_lea.vmem [#allocation9], %s309
        %v312 = vld [vmem:[%s270] sm:$0xf]
        %v313 = vld [vmem:[#allocation5] sm:$0xf]
        %v314 = vld [vmem:[#allocation7] sm:$0xf]
        %vm315 = vcmask 64512
        %v317 = vsel %vm315, %v312, 0
        %v320 = vsel %vm315, %v313, 0
        %322 = vmatpush.bf16.xpose.msra.mxu0 0
        %323 = vmatpush.bf16.xpose.msra.mxu0 0
        %324 = vmatpush.bf16.xpose.msra.mxu0 0
        %325 = vmatpush.bf16.xpose.msra.mxu0 0
        %326 = vmatpush.bf16.xpose.msra.mxu0 0
        %327 = vmatpush.bf16.xpose.msra.mxu0 0
        %328 = vmatpush.bf16.xpose.msra.mxu0 0
        %329 = vmatpush.bf16.xpose.msra.mxu0 %v320
        %330 = vmatmul.bf16.gmra.mxu0 %v317
        %v331 = vpop.f32.mrf.mxu0
        %v332 = vadd.f32 0.0, %v331
        %v333 = vpop.f32.mrf.mxu0
        %334 = vdwg.mxu0
        %v335 = vmul.f32 %v332, 0.35355338
        %v336 = vsel %vm315, %v335, -inf
        %337 = vmax.xlane.f32.xlu0 %v336
        %v338 = vpop.xlane.xlu0 %337
        %v339 = vsub.f32 %v335, %v338
        %v340 = vmul.f32 %v339, 1.442695
        %v341 = vpow.pop %v340
        %v342 = vsel %vm315, %v341, 0.0
        %343 = vadd.xlane.f32.xlu0 %v342
        %v344 = vpop.xlane.xlu0 %343
        %v345 = vrcp.pop %v344
        %v346 = vmul.f32 %v341, %v345
        %v347 = vpack.c.bf16 %v346, %v346
        %vm348 = vcmask 60416
        %349 = vst.msk [vmem:[%s310] sm:$0xf] %vm348, %v347
        %v351 = vsel %vm315, %v347, 0
        %vm353 = vcmask 1043456
        %v355 = vsel %vm353, %v314, 0
        %357 = vmatpush.bf16.msra.mxu0 0
        %358 = vmatpush.bf16.msra.mxu0 0
        %359 = vmatpush.bf16.msra.mxu0 0
        %360 = vmatpush.bf16.msra.mxu0 0
        %361 = vmatpush.bf16.msra.mxu0 0
        %362 = vmatpush.bf16.msra.mxu0 0
        %363 = vmatpush.bf16.msra.mxu0 0
        %364 = vmatpush.bf16.msra.mxu0 %v355
        %365 = vmatmul.bf16.gmra.mxu0 %v351
        %v366 = vpop.f32.mrf.mxu0
        %v367 = vadd.f32 0.0, %v366
        %v368 = vpop.f32.mrf.mxu0
        %369 = vdwg.mxu0
        %370 = vst.msk [vmem:[%s303] sm:$0xff] %vm315, %v367
        %s371 = sand.u32 %s143, 1
        %s372 = scalar_lea.sflag [#allocation4], %s371
        %s373 = sand.u32 %s143, 1
        %s374 = smul.addr %s373, 8
        %s375 = scalar_lea.vmem [#allocation8], %s374
        %s376 = sand.u32 %s173, 1
        %s377 = scalar_lea.sflag [#allocation10], %s376
        %s378 = sand.u32 %s173, 1
        %s379 = smul.addr %s378, 4
        %s380 = scalar_lea.vmem [#allocation9], %s379
        // Predicated region
        $region45: #{tpu_custom_call.1} parent=31 // pred_check
          %p381 = pneg %p153
        $region46: #{tpu_custom_call.1} parent=31 // pred_check_branch
          %383 = sbr.rel (%p381) target = $region48
        $region47: #{tpu_custom_call.1} parent=31 // pred_region
          %385 = vsyncadd %s372, 0
          %s386 = sadd.s32 %s33, %s32
          %s387 = smul.addr %s31, 4
          %s388 = sadd.s32 %s386, %s387
          %s389 = smul.addr %s388, 8
          %s390 = scalar_lea.hbm %s3, %s389
          %s392 = sshll.u32 %s375, 4
          %s393 = int_to_ptr.vmem [resolvable:$true] %s392
          %s394 = sshll.u32 %s390, 4
          %s395 = int_to_ptr.hbm [resolvable:$true] %s394
          %397 = dma.vmem_to_hbm [thread:$0]  %s393, 128, %s395, %s372
        $region48: #{tpu_custom_call.1} parent=31 // pred_fallthru
          _
        // Predicated region
        $region49: #{tpu_custom_call.1} parent=31 // pred_check
          %p398 = pneg %p183
        $region50: #{tpu_custom_call.1} parent=31 // pred_check_branch
          %400 = sbr.rel (%p398) target = $region52
        $region51: #{tpu_custom_call.1} parent=31 // pred_region
          %402 = vsyncadd %s377, 0
          %s403 = sadd.s32 %s33, %s32
          %s404 = smul.addr %s31, 4
          %s405 = sadd.s32 %s403, %s404
          %s406 = smul.addr %s405, 4
          %s407 = scalar_lea.hbm %s4, %s406
          %s409 = sshll.u32 %s380, 4
          %s410 = int_to_ptr.vmem [resolvable:$true] %s409
          %s411 = sshll.u32 %s407, 4
          %s412 = int_to_ptr.hbm [resolvable:$true] %s411
          %414 = dma.vmem_to_hbm [thread:$0]  %s410, 64, %s412, %s377
        $region52: #{tpu_custom_call.1} parent=31 // pred_fallthru
          _
      $region32: #{tpu_custom_call.1} parent=5 // pred_fallthru
        _
      %p415 = scmp.le.s32.totalorder 2, %s21
      // Predicated region
      $region53: #{tpu_custom_call.1} parent=5 // pred_check
        %p416 = pneg %p415
      $region54: #{tpu_custom_call.1} parent=5 // pred_check_branch
        %418 = sbr.rel (%p416) target = $region56
      $region55: #{tpu_custom_call.1} parent=5 // pred_region
        %s419 = ssub.s32 %s21, 2
        // Predicated region
        $region57: #{tpu_custom_call.1} parent=55 // pred_check
          %p420 = pneg %p159
        $region58: #{tpu_custom_call.1} parent=55 // pred_check_branch
          %422 = sbr.rel (%p420) target = $region60
        $region59: #{tpu_custom_call.1} parent=55 // pred_region
          %s423 = sand.u32 %s144, 1
          %s424 = scalar_lea.sflag [#allocation4], %s423
          %s425 = sand.u32 %s144, 1
          %s426 = smul.addr %s425, 8
          %s427 = scalar_lea.vmem [#allocation8], %s426
          %429 = dma.done %s424, 128
        $region60: #{tpu_custom_call.1} parent=55 // pred_fallthru
          _
        // Predicated region
        $region61: #{tpu_custom_call.1} parent=55 // pred_check
          %p430 = pneg %p189
        $region62: #{tpu_custom_call.1} parent=55 // pred_check_branch
          %432 = sbr.rel (%p430) target = $region64
        $region63: #{tpu_custom_call.1} parent=55 // pred_region
          %s433 = sand.u32 %s174, 1
          %s434 = scalar_lea.sflag [#allocation10], %s433
          %s435 = sand.u32 %s174, 1
          %s436 = smul.addr %s435, 4
          %s437 = scalar_lea.vmem [#allocation9], %s436
          %439 = dma.done %s434, 64
        $region64: #{tpu_custom_call.1} parent=55 // pred_fallthru
          _
      $region56: #{tpu_custom_call.1} parent=5 // pred_fallthru
        _
    $region6: #{tpu_custom_call.1} parent=1 // loop_footer
      %s25 = sadd.s32 1, %s21
    $region7: #{tpu_custom_call.1} parent=1 // loop_footer_branch
      %20 = sbr.rel target = $region3
    $region8: #{tpu_custom_call.1} parent=1 // loop_exit
      _
    %440 = vsyncpa [#allocation3], 1
    %s441 = scalar_lea.sflag [#allocation3], 1
    %442 = vsyncpa %s441, 1
    %443 = vsyncpa [#allocation6], 1
    %444 = vsyncpa [#allocation4], 1
    %s445 = scalar_lea.sflag [#allocation4], 1
    %446 = vsyncpa %s445, 1
    %447 = vsyncpa [#allocation10], 1
    %s448 = scalar_lea.sflag [#allocation10], 1
    %449 = vsyncpa %s448, 1

// kernel: tpu_custom_call.1
$region0: #{tpu_custom_call.1}
  #allocation0 [shape = 'u32[]', space=smem, size = 0x4, offset = 0x4, fixed_abs, tag = 'smem constant byte address 0x4 - core index']
  #allocation1 [shape = 'u32[72,128]{1,0:T(1,128)}', space=vmem, size = 0x9000, scoped, tag = 'internal scratch']
  %s0 = inlined_call_operand.hbm [shape: bf16[2,4,8,8], index: 0, kind: input, shape index: {}]
  %s1 = inlined_call_operand.hbm [shape: bf16[2,4,8,8], index: 1, kind: input, shape index: {}]
  %s2 = inlined_call_operand.hbm [shape: bf16[2,4,8,8], index: 2, kind: input, shape index: {}]
  %s3 = inlined_call_operand.hbm [shape: f32[2,4,8,8], index: 3, kind: output, shape index: {0}]
  %s4 = inlined_call_operand.hbm [shape: bf16[2,4,8,8], index: 4, kind: output, shape index: {1}]
  %5 = xla_tuple %s3, %s4
  %s6 = sld [smem:[#allocation0]]
  $region65: #{tpu_custom_call.1} parent=0
    _
  %s8 = ssub.s32 1, %s6
  %s9 = scalar_select 0, %s8, %s6
  $region1: #{tpu_custom_call.1} parent=0
    #allocation2 [shape = 'u8[4096]{0}', space=vmem, size = 0x1000, scoped, tag = 'input window, operand 0']
    #allocation3 [shape = 's32[2]{0}', space=sflag, size = 0x8, scoped, tag = 'scoped memory for tpu_custom_call.1']
    #allocation4 [shape = 's32[2]{0}', space=sflag, size = 0x8, scoped, tag = 'scoped memory for tpu_custom_call.1']
    #allocation5 [shape = 'u8[4096]{0}', space=vmem, size = 0x1000, scoped, tag = 'input window, operand 1']
    #allocation6 [shape = 's32[2]{0}', space=sflag, size = 0x8, scoped, tag = 'scoped memory for tpu_custom_call.1']
    #allocation7 [shape = 'u8[4096]{0}', space=vmem, size = 0x1000, scoped, tag = 'input window, operand 2']
    #allocation8 [shape = 'u8[8192]{0}', space=vmem, size = 0x2000, scoped, tag = 'output window, operand 0']
    #allocation9 [shape = 'u8[4096]{0}', space=vmem, size = 0x1000, scoped, tag = 'output window, operand 1']
    #allocation10 [shape = 's32[2]{0}', space=sflag, size = 0x8, scoped, tag = 'scoped memory for tpu_custom_call.1']
    %10 = vsyncpa [#allocation3], 0
    %s11 = scalar_lea.sflag [#allocation3], 1
    %12 = vsyncpa %s11, 0
    %13 = vsyncpa [#allocation6], 0
    %s14 = scalar_lea.sflag [#allocation6], 1
    %15 = vsyncpa %s14, 0
    %16 = vsyncpa [#allocation4], 0
    %s17 = scalar_lea.sflag [#allocation4], 1
    %18 = vsyncpa %s17, 0
    %19 = vsyncpa [#allocation10], 0
    %s20 = scalar_lea.sflag [#allocation10], 1
    %21 = vsyncpa %s20, 0
    loop: start=0, step=1, limit=10
    $region2: #{tpu_custom_call.1} parent=1 // loop_pre_header
      _
    $region3: #{tpu_custom_call.1} parent=1 // loop_header
      %s23 = sphi 0, %s27
      %p24 = scmp.ge.s32.totalorder %s23, 10
      %s30 = sphi 0, %s49
      %s31 = sphi 0, %s45
      %s32 = sphi 0, %s41
      %s33 = sphi 0, %s30
      %s34 = sphi 0, %s31
      %s35 = sphi 0, %s32
      %s36 = sphi 0, %s33
      %s37 = sphi 0, %s34
      %s38 = sphi 0, %s35
      %s56 = sphi 0, %s58
      %s59 = sphi 0, %s56
      %s60 = sphi 0, %s59
      %s76 = sphi 0, %s60
      %s84 = sphi 0, %s86
      %s87 = sphi 0, %s84
      %s88 = sphi 0, %s87
      %s104 = sphi 0, %s88
      %s112 = sphi 0, %s114
      %s115 = sphi 0, %s112
      %s116 = sphi 0, %s115
      %s132 = sphi 0, %s116
      %s142 = sphi 0, %s144
      %s145 = sphi 0, %s142
      %s146 = sphi 0, %s145
      %s162 = sphi 0, %s146
      %s172 = sphi 0, %s174
      %s175 = sphi 0, %s172
      %s176 = sphi 0, %s175
      %s192 = sphi 0, %s176
    $region4: #{tpu_custom_call.1} parent=1 // loop_header_branch
      %26 = sbr.rel (%p24) target = $region8
    $region5: #{tpu_custom_call.1} parent=1 // loop_body
      %s28 = ssub.s32 %s23, 1
      %s29 = ssub.s32 %s23, 2
      %s39 = sadd.s32 1, %s32
      %p40 = scmp.ge.s32.totalorder %s39, 1
      %s41 = scalar_select %p40, 0, %s39
      %s42 = sadd.s32 1, %s31
      %s43 = scalar_select %p40, %s42, %s31
      %p44 = scmp.ge.s32.totalorder %s43, 4
      %s45 = scalar_select %p44, 0, %s43
      %s46 = sadd.s32 1, %s30
      %s47 = scalar_select %p44, %s46, %s30
      %p48 = scmp.ge.s32.totalorder %s47, 2
      %s49 = scalar_select %p48, 0, %s47
      %s50 = ssub.s32 %s30, %s49
      %s51 = ssub.s32 %s31, %s45
      %s52 = sor.u32 %s50, %s51
      %s53 = ssub.s32 %s32, %s41
      %s54 = sor.u32 %s52, %s53
      %p55 = scmp.eq.s32.totalorder %s54, 0
      %s57 = sadd.s32 %s56, 1
      %s58 = scalar_select %p55, %s56, %s57
      %p61 = pneg %p55
      %p62 = scmp.eq.s32.totalorder %s23, 7
      %p63 = por %p61, %p62
      %p64 = scmp.ne.s32.totalorder %s56, %s59
      %p65 = scmp.eq.s32.totalorder %s23, 0
      %p66 = por %p64, %p65
      %p67 = scmp.ne.s32.totalorder %s56, %s59
      %p68 = scmp.eq.s32.totalorder %s28, 7
      %p69 = por %p67, %p68
      %p70 = scmp.ne.s32.totalorder %s59, %s60
      %p71 = scmp.eq.s32.totalorder %s28, 0
      %p72 = por %p70, %p71
      %p73 = scmp.ne.s32.totalorder %s59, %s60
      %p74 = scmp.eq.s32.totalorder %s29, 7
      %p75 = por %p73, %p74
      %p77 = scmp.ne.s32.totalorder %s60, %s76
      %p78 = scmp.eq.s32.totalorder %s29, 0
      %p79 = por %p77, %p78
      %s80 = ssub.s32 %s30, %s49
      %s81 = ssub.s32 %s31, %s45
      %s82 = sor.u32 %s80, %s81
      %p83 = scmp.eq.s32.totalorder %s82, 0
      %s85 = sadd.s32 %s84, 1
      %s86 = scalar_select %p83, %s84, %s85
      %p89 = pneg %p83
      %p90 = scmp.eq.s32.totalorder %s23, 7
      %p91 = por %p89, %p90
      %p92 = scmp.ne.s32.totalorder %s84, %s87
      %p93 = scmp.eq.s32.totalorder %s23, 0
      %p94 = por %p92, %p93
      %p95 = scmp.ne.s32.totalorder %s84, %s87
      %p96 = scmp.eq.s32.totalorder %s28, 7
      %p97 = por %p95, %p96
      %p98 = scmp.ne.s32.totalorder %s87, %s88
      %p99 = scmp.eq.s32.totalorder %s28, 0
      %p100 = por %p98, %p99
      %p101 = scmp.ne.s32.totalorder %s87, %s88
      %p102 = scmp.eq.s32.totalorder %s29, 7
      %p103 = por %p101, %p102
      %p105 = scmp.ne.s32.totalorder %s88, %s104
      %p106 = scmp.eq.s32.totalorder %s29, 0
      %p107 = por %p105, %p106
      %s108 = ssub.s32 %s30, %s49
      %s109 = ssub.s32 %s31, %s45
      %s110 = sor.u32 %s108, %s109
      %p111 = scmp.eq.s32.totalorder %s110, 0
      %s113 = sadd.s32 %s112, 1
      %s114 = scalar_select %p111, %s112, %s113
      %p117 = pneg %p111
      %p118 = scmp.eq.s32.totalorder %s23, 7
      %p119 = por %p117, %p118
      %p120 = scmp.ne.s32.totalorder %s112, %s115
      %p121 = scmp.eq.s32.totalorder %s23, 0
      %p122 = por %p120, %p121
      %p123 = scmp.ne.s32.totalorder %s112, %s115
      %p124 = scmp.eq.s32.totalorder %s28, 7
      %p125 = por %p123, %p124
      %p126 = scmp.ne.s32.totalorder %s115, %s116
      %p127 = scmp.eq.s32.totalorder %s28, 0
      %p128 = por %p126, %p127
      %p129 = scmp.ne.s32.totalorder %s115, %s116
      %p130 = scmp.eq.s32.totalorder %s29, 7
      %p131 = por %p129, %p130
      %p133 = scmp.ne.s32.totalorder %s116, %s132
      %p134 = scmp.eq.s32.totalorder %s29, 0
      %p135 = por %p133, %p134
      %s136 = ssub.s32 %s30, %s49
      %s137 = ssub.s32 %s31, %s45
      %s138 = sor.u32 %s136, %s137
      %s139 = ssub.s32 %s32, %s41
      %s140 = sor.u32 %s138, %s139
      %p141 = scmp.eq.s32.totalorder %s140, 0
      %s143 = sadd.s32 %s142, 1
      %s144 = scalar_select %p141, %s142, %s143
      %p147 = pneg %p141
      %p148 = scmp.eq.s32.totalorder %s23, 7
      %p149 = por %p147, %p148
      %p150 = scmp.ne.s32.totalorder %s142, %s145
      %p151 = scmp.eq.s32.totalorder %s23, 0
      %p152 = por %p150, %p151
      %p153 = scmp.ne.s32.totalorder %s142, %s145
      %p154 = scmp.eq.s32.totalorder %s28, 7
      %p155 = por %p153, %p154
      %p156 = scmp.ne.s32.totalorder %s145, %s146
      %p157 = scmp.eq.s32.totalorder %s28, 0
      %p158 = por %p156, %p157
      %p159 = scmp.ne.s32.totalorder %s145, %s146
      %p160 = scmp.eq.s32.totalorder %s29, 7
      %p161 = por %p159, %p160
      %p163 = scmp.ne.s32.totalorder %s146, %s162
      %p164 = scmp.eq.s32.totalorder %s29, 0
      %p165 = por %p163, %p164
      %s166 = ssub.s32 %s30, %s49
      %s167 = ssub.s32 %s31, %s45
      %s168 = sor.u32 %s166, %s167
      %s169 = ssub.s32 %s32, %s41
      %s170 = sor.u32 %s168, %s169
      %p171 = scmp.eq.s32.totalorder %s170, 0
      %s173 = sadd.s32 %s172, 1
      %s174 = scalar_select %p171, %s172, %s173
      %p177 = pneg %p171
      %p178 = scmp.eq.s32.totalorder %s23, 7
      %p179 = por %p177, %p178
      %p180 = scmp.ne.s32.totalorder %s172, %s175
      %p181 = scmp.eq.s32.totalorder %s23, 0
      %p182 = por %p180, %p181
      %p183 = scmp.ne.s32.totalorder %s172, %s175
      %p184 = scmp.eq.s32.totalorder %s28, 7
      %p185 = por %p183, %p184
      %p186 = scmp.ne.s32.totalorder %s175, %s176
      %p187 = scmp.eq.s32.totalorder %s28, 0
      %p188 = por %p186, %p187
      %p189 = scmp.ne.s32.totalorder %s175, %s176
      %p190 = scmp.eq.s32.totalorder %s29, 7
      %p191 = por %p189, %p190
      %p193 = scmp.ne.s32.totalorder %s176, %s192
      %p194 = scmp.eq.s32.totalorder %s29, 0
      %p195 = por %p193, %p194
      %p196 = scmp.le.s32.totalorder 1, %s23
      %p197 = scmp.lt.s32.totalorder %s23, 9
      %p198 = pnand %p196, %p197
      %p199 = pneg %p198
      // Predicated region
      $region9: #{tpu_custom_call.1} parent=5 // pred_check
        _
      $region10: #{tpu_custom_call.1} parent=5 // pred_check_branch
        %201 = sbr.rel (%p198) target = $region12
      $region11: #{tpu_custom_call.1} parent=5 // pred_region
        %s202 = ssub.s32 %s23, 1
      $region12: #{tpu_custom_call.1} parent=5 // pred_fallthru
        _
      %p203 = scmp.lt.s32.totalorder %s23, 8
      // Predicated region
      $region13: #{tpu_custom_call.1} parent=5 // pred_check
        %p204 = pneg %p203
      $region14: #{tpu_custom_call.1} parent=5 // pred_check_branch
        %206 = sbr.rel (%p204) target = $region16
      $region15: #{tpu_custom_call.1} parent=5 // pred_region
        // Predicated region
        $region17: #{tpu_custom_call.1} parent=15 // pred_check
          %p207 = pneg %p66
        $region18: #{tpu_custom_call.1} parent=15 // pred_check_branch
          %209 = sbr.rel (%p207) target = $region20
        $region19: #{tpu_custom_call.1} parent=15 // pred_region
          %s210 = sand.u32 %s56, 1
          %s211 = scalar_lea.sflag [#allocation3], %s210
          %s212 = sand.u32 %s56, 1
          %s213 = smul.addr %s212, 4
          %s214 = scalar_lea.vmem [#allocation2], %s213
          %216 = vsyncadd %s211, 0
          %s217 = sadd.s32 %s32, %s31
          %s218 = smul.addr %s30, 4
          %s219 = sadd.s32 %s217, %s218
          %s220 = smul.addr %s219, 4
          %s221 = scalar_lea.hbm %s0, %s220
          %s223 = sshll.u32 %s221, 4
          %s224 = int_to_ptr.hbm [resolvable:$true] %s223
          %s225 = sshll.u32 %s214, 4
          %s226 = int_to_ptr.vmem [resolvable:$true] %s225
          %228 = dma.hbm_to_vmem [thread:$0]  %s224, 64, %s226, %s211
        $region20: #{tpu_custom_call.1} parent=15 // pred_fallthru
          _
        // Predicated region
        $region21: #{tpu_custom_call.1} parent=15 // pred_check
          %p229 = pneg %p94
        $region22: #{tpu_custom_call.1} parent=15 // pred_check_branch
          %231 = sbr.rel (%p229) target = $region24
        $region23: #{tpu_custom_call.1} parent=15 // pred_region
          %s232 = sand.u32 %s23, 1
          %s233 = scalar_lea.sflag [#allocation6], %s232
          %s234 = sand.u32 %s84, 1
          %s235 = smul.addr %s234, 4
          %s236 = scalar_lea.vmem [#allocation5], %s235
          %238 = vsyncadd %s233, 0
          %s239 = smul.addr %s30, 4
          %s240 = sadd.s32 %s31, %s239
          %s241 = smul.addr %s240, 4
          %s242 = scalar_lea.hbm %s1, %s241
          %s244 = sshll.u32 %s242, 4
          %s245 = int_to_ptr.hbm [resolvable:$true] %s244
          %s246 = sshll.u32 %s236, 4
          %s247 = int_to_ptr.vmem [resolvable:$true] %s246
          %249 = dma.hbm_to_vmem [thread:$0]  %s245, 64, %s247, %s233
        $region24: #{tpu_custom_call.1} parent=15 // pred_fallthru
          _
        // Predicated region
        $region25: #{tpu_custom_call.1} parent=15 // pred_check
          %p250 = pneg %p122
        $region26: #{tpu_custom_call.1} parent=15 // pred_check_branch
          %252 = sbr.rel (%p250) target = $region28
        $region27: #{tpu_custom_call.1} parent=15 // pred_region
          %s253 = sand.u32 %s23, 1
          %s254 = scalar_lea.sflag [#allocation6], %s253
          %s255 = sand.u32 %s112, 1
          %s256 = smul.addr %s255, 4
          %s257 = scalar_lea.vmem [#allocation7], %s256
          %259 = vsyncadd %s254, 0
          %s260 = smul.addr %s30, 4
          %s261 = sadd.s32 %s31, %s260
          %s262 = smul.addr %s261, 4
          %s263 = scalar_lea.hbm %s2, %s262
          %s265 = sshll.u32 %s263, 4
          %s266 = int_to_ptr.hbm [resolvable:$true] %s265
          %s267 = sshll.u32 %s257, 4
          %s268 = int_to_ptr.vmem [resolvable:$true] %s267
          %270 = dma.hbm_to_vmem [thread:$0]  %s266, 64, %s268, %s254
        $region28: #{tpu_custom_call.1} parent=15 // pred_fallthru
          _
      $region16: #{tpu_custom_call.1} parent=5 // pred_fallthru
        _
      %p271 = scmp.le.s32.totalorder 1, %s23
      %p272 = scmp.lt.s32.totalorder %s23, 9
      %p273 = pnand %p271, %p272
      %p274 = pneg %p273
      // Predicated region
      $region29: #{tpu_custom_call.1} parent=5 // pred_check
        _
      $region30: #{tpu_custom_call.1} parent=5 // pred_check_branch
        %276 = sbr.rel (%p273) target = $region32
      $region31: #{tpu_custom_call.1} parent=5 // pred_region
        %s277 = ssub.s32 %s23, 1
        %s278 = sand.u32 %s59, 1
        %s279 = scalar_lea.sflag [#allocation3], %s278
        %s280 = sand.u32 %s59, 1
        %s281 = smul.addr %s280, 4
        %s282 = scalar_lea.vmem [#allocation2], %s281
        // Predicated region
        $region33: #{tpu_custom_call.1} parent=31 // pred_check
          %p283 = pneg %p72
        $region34: #{tpu_custom_call.1} parent=31 // pred_check_branch
          %285 = sbr.rel (%p283) target = $region36
        $region35: #{tpu_custom_call.1} parent=31 // pred_region
          %287 = dma.done %s279, 64
        $region36: #{tpu_custom_call.1} parent=31 // pred_fallthru
          _
        %s288 = sand.u32 %s28, 1
        %s289 = scalar_lea.sflag [#allocation6], %s288
        %s290 = sand.u32 %s87, 1
        %s291 = smul.addr %s290, 4
        %s292 = scalar_lea.vmem [#allocation5], %s291
        // Predicated region
        $region37: #{tpu_custom_call.1} parent=31 // pred_check
          %p293 = pneg %p100
        $region38: #{tpu_custom_call.1} parent=31 // pred_check_branch
          %295 = sbr.rel (%p293) target = $region40
        $region39: #{tpu_custom_call.1} parent=31 // pred_region
          %297 = dma.done %s289, 64
        $region40: #{tpu_custom_call.1} parent=31 // pred_fallthru
          _
        %s298 = sand.u32 %s28, 1
        %s299 = scalar_lea.sflag [#allocation6], %s298
        %s300 = sand.u32 %s115, 1
        %s301 = smul.addr %s300, 4
        %s302 = scalar_lea.vmem [#allocation7], %s301
        // Predicated region
        $region41: #{tpu_custom_call.1} parent=31 // pred_check
          %p303 = pneg %p128
        $region42: #{tpu_custom_call.1} parent=31 // pred_check_branch
          %305 = sbr.rel (%p303) target = $region44
        $region43: #{tpu_custom_call.1} parent=31 // pred_region
          %307 = dma.done %s299, 64
        $region44: #{tpu_custom_call.1} parent=31 // pred_fallthru
          _
        %s308 = sand.u32 %s59, 1
        %s309 = scalar_lea.sflag [#allocation3], %s308
        %s310 = sand.u32 %s59, 1
        %s311 = smul.addr %s310, 4
        %s312 = scalar_lea.vmem [#allocation2], %s311
        %p313 = pneg %p72
        %p314 = pneg %p69
        %s315 = sand.u32 %s28, 1
        %s316 = scalar_lea.sflag [#allocation6], %s315
        %s317 = sand.u32 %s87, 1
        %s318 = smul.addr %s317, 4
        %s319 = scalar_lea.vmem [#allocation5], %s318
        %p320 = pneg %p100
        %p321 = pneg %p97
        %s322 = sand.u32 %s28, 1
        %s323 = scalar_lea.sflag [#allocation6], %s322
        %s324 = sand.u32 %s115, 1
        %s325 = smul.addr %s324, 4
        %s326 = scalar_lea.vmem [#allocation7], %s325
        %p327 = pneg %p128
        %p328 = pneg %p125
        %p329 = pneg %p158
        %p330 = pneg %p155
        %s331 = sand.u32 %s145, 1
        %s332 = scalar_lea.sflag [#allocation4], %s331
        %s333 = sand.u32 %s145, 1
        %s334 = smul.addr %s333, 8
        %s335 = scalar_lea.vmem [#allocation8], %s334
        %p336 = pneg %p188
        %p337 = pneg %p185
        %s338 = sand.u32 %s175, 1
        %s339 = scalar_lea.sflag [#allocation10], %s338
        %s340 = sand.u32 %s175, 1
        %s341 = smul.addr %s340, 4
        %s342 = scalar_lea.vmem [#allocation9], %s341
        %v344 = vld [vmem:[%s282] sm:$0xf]
        %v345 = vld [vmem:[%s292] sm:$0xf]
        %v346 = vld [vmem:[%s302] sm:$0xf]
        %vm347 = vcmask 64512
        %v349 = vsel %vm347, %v344, 0
        %v352 = vsel %vm347, %v345, 0
        %354 = vmatpush.bf16.xpose.msra.mxu0 0
        %355 = vmatpush.bf16.xpose.msra.mxu0 0
        %356 = vmatpush.bf16.xpose.msra.mxu0 0
        %357 = vmatpush.bf16.xpose.msra.mxu0 0
        %358 = vmatpush.bf16.xpose.msra.mxu0 0
        %359 = vmatpush.bf16.xpose.msra.mxu0 0
        %360 = vmatpush.bf16.xpose.msra.mxu0 0
        %361 = vmatpush.bf16.xpose.msra.mxu0 %v352
        %362 = vmatmul.bf16.gmra.mxu0 %v349
        %v363 = vpop.f32.mrf.mxu0
        %v364 = vadd.f32 0.0, %v363
        %v365 = vpop.f32.mrf.mxu0
        %366 = vdwg.mxu0
        %v367 = vmul.f32 %v364, 0.35355338
        %v368 = vsel %vm347, %v367, -inf
        %369 = vmax.xlane.f32.xlu0 %v368
        %v370 = vpop.xlane.xlu0 %369
        %v371 = vsub.f32 %v367, %v370
        %v372 = vmul.f32 %v371, 1.442695
        %v373 = vpow.pop %v372
        %v374 = vsel %vm347, %v373, 0.0
        %375 = vadd.xlane.f32.xlu0 %v374
        %v376 = vpop.xlane.xlu0 %375
        %v377 = vrcp.pop %v376
        %v378 = vmul.f32 %v373, %v377
        %v379 = vpack.c.bf16 %v378, %v378
        %vm380 = vcmask 60416
        %381 = vst.msk [vmem:[%s342] sm:$0xf] %vm380, %v379
        %v383 = vsel %vm347, %v379, 0
        %vm385 = vcmask 1043456
        %v387 = vsel %vm385, %v346, 0
        %389 = vmatpush.bf16.msra.mxu0 0
        %390 = vmatpush.bf16.msra.mxu0 0
        %391 = vmatpush.bf16.msra.mxu0 0
        %392 = vmatpush.bf16.msra.mxu0 0
        %393 = vmatpush.bf16.msra.mxu0 0
        %394 = vmatpush.bf16.msra.mxu0 0
        %395 = vmatpush.bf16.msra.mxu0 0
        %396 = vmatpush.bf16.msra.mxu0 %v387
        %397 = vmatmul.bf16.gmra.mxu0 %v383
        %v398 = vpop.f32.mrf.mxu0
        %v399 = vadd.f32 0.0, %v398
        %v400 = vpop.f32.mrf.mxu0
        %401 = vdwg.mxu0
        %402 = vst.msk [vmem:[%s335] sm:$0xff] %vm347, %v399
        %s403 = sand.u32 %s145, 1
        %s404 = scalar_lea.sflag [#allocation4], %s403
        %s405 = sand.u32 %s145, 1
        %s406 = smul.addr %s405, 8
        %s407 = scalar_lea.vmem [#allocation8], %s406
        %s408 = sand.u32 %s175, 1
        %s409 = scalar_lea.sflag [#allocation10], %s408
        %s410 = sand.u32 %s175, 1
        %s411 = smul.addr %s410, 4
        %s412 = scalar_lea.vmem [#allocation9], %s411
        // Predicated region
        $region45: #{tpu_custom_call.1} parent=31 // pred_check
          %p413 = pneg %p155
        $region46: #{tpu_custom_call.1} parent=31 // pred_check_branch
          %415 = sbr.rel (%p413) target = $region48
        $region47: #{tpu_custom_call.1} parent=31 // pred_region
          %417 = vsyncadd %s404, 0
          %s418 = sadd.s32 %s35, %s34
          %s419 = smul.addr %s33, 4
          %s420 = sadd.s32 %s418, %s419
          %s421 = smul.addr %s420, 8
          %s422 = scalar_lea.hbm %s3, %s421
          %s424 = sshll.u32 %s407, 4
          %s425 = int_to_ptr.vmem [resolvable:$true] %s424
          %s426 = sshll.u32 %s422, 4
          %s427 = int_to_ptr.hbm [resolvable:$true] %s426
          %429 = dma.vmem_to_hbm [thread:$0]  %s425, 128, %s427, %s404
        $region48: #{tpu_custom_call.1} parent=31 // pred_fallthru
          _
        // Predicated region
        $region49: #{tpu_custom_call.1} parent=31 // pred_check
          %p430 = pneg %p185
        $region50: #{tpu_custom_call.1} parent=31 // pred_check_branch
          %432 = sbr.rel (%p430) target = $region52
        $region51: #{tpu_custom_call.1} parent=31 // pred_region
          %434 = vsyncadd %s409, 0
          %s435 = sadd.s32 %s35, %s34
          %s436 = smul.addr %s33, 4
          %s437 = sadd.s32 %s435, %s436
          %s438 = smul.addr %s437, 4
          %s439 = scalar_lea.hbm %s4, %s438
          %s441 = sshll.u32 %s412, 4
          %s442 = int_to_ptr.vmem [resolvable:$true] %s441
          %s443 = sshll.u32 %s439, 4
          %s444 = int_to_ptr.hbm [resolvable:$true] %s443
          %446 = dma.vmem_to_hbm [thread:$0]  %s442, 64, %s444, %s409
        $region52: #{tpu_custom_call.1} parent=31 // pred_fallthru
          _
      $region32: #{tpu_custom_call.1} parent=5 // pred_fallthru
        _
      %p447 = scmp.le.s32.totalorder 2, %s23
      // Predicated region
      $region53: #{tpu_custom_call.1} parent=5 // pred_check
        %p448 = pneg %p447
      $region54: #{tpu_custom_call.1} parent=5 // pred_check_branch
        %450 = sbr.rel (%p448) target = $region56
      $region55: #{tpu_custom_call.1} parent=5 // pred_region
        %s451 = ssub.s32 %s23, 2
        // Predicated region
        $region57: #{tpu_custom_call.1} parent=55 // pred_check
          %p452 = pneg %p161
        $region58: #{tpu_custom_call.1} parent=55 // pred_check_branch
          %454 = sbr.rel (%p452) target = $region60
        $region59: #{tpu_custom_call.1} parent=55 // pred_region
          %s455 = sand.u32 %s146, 1
          %s456 = scalar_lea.sflag [#allocation4], %s455
          %s457 = sand.u32 %s146, 1
          %s458 = smul.addr %s457, 8
          %s459 = scalar_lea.vmem [#allocation8], %s458
          %461 = dma.done %s456, 128
        $region60: #{tpu_custom_call.1} parent=55 // pred_fallthru
          _
        // Predicated region
        $region61: #{tpu_custom_call.1} parent=55 // pred_check
          %p462 = pneg %p191
        $region62: #{tpu_custom_call.1} parent=55 // pred_check_branch
          %464 = sbr.rel (%p462) target = $region64
        $region63: #{tpu_custom_call.1} parent=55 // pred_region
          %s465 = sand.u32 %s176, 1
          %s466 = scalar_lea.sflag [#allocation10], %s465
          %s467 = sand.u32 %s176, 1
          %s468 = smul.addr %s467, 4
          %s469 = scalar_lea.vmem [#allocation9], %s468
          %471 = dma.done %s466, 64
        $region64: #{tpu_custom_call.1} parent=55 // pred_fallthru
          _
      $region56: #{tpu_custom_call.1} parent=5 // pred_fallthru
        _
    $region6: #{tpu_custom_call.1} parent=1 // loop_footer
      %s27 = sadd.s32 1, %s23
    $region7: #{tpu_custom_call.1} parent=1 // loop_footer_branch
      %22 = sbr.rel target = $region3
    $region8: #{tpu_custom_call.1} parent=1 // loop_exit
      _
    %472 = vsyncpa [#allocation3], 1
    %s473 = scalar_lea.sflag [#allocation3], 1
    %474 = vsyncpa %s473, 1
    %475 = vsyncpa [#allocation6], 1
    %s476 = scalar_lea.sflag [#allocation6], 1
    %477 = vsyncpa %s476, 1
    %478 = vsyncpa [#allocation4], 1
    %s479 = scalar_lea.sflag [#allocation4], 1
    %480 = vsyncpa %s479, 1
    %481 = vsyncpa [#allocation10], 1
    %s482 = scalar_lea.sflag [#allocation10], 1
    %483 = vsyncpa %s482, 1

</llo_original>
